<compile_context>
chip_gen: v7x
topology: tpu7x:2x2x1
jax: 0.10.0
libtpu: 0.0.40
codegen_flags: <defaults>
</compile_context>

<pallas_src>
import functools

import jax
import jax.numpy as jnp
from jax.experimental import pallas as pl
from jax.experimental.pallas import tpu as pltpu


def _round_up(x, m):
    return (x + m - 1) // m * m


def _pool_kernel(x_ref, o_ref, *, pool_type):
    """x_ref: VMEM (7, TB, TN); o_ref: VMEM (TB, TN)."""
    if pool_type == "mean":
        f32 = jnp.float32
        # 3-level tree reduction over the 7 neighbor slabs; each x_ref[k] is a
        # contiguous full-tile load (no sublane-strided extracts).
        s01 = x_ref[0].astype(f32) + x_ref[1].astype(f32)
        s23 = x_ref[2].astype(f32) + x_ref[3].astype(f32)
        s45 = x_ref[4].astype(f32) + x_ref[5].astype(f32)
        s = (s01 + s23) + (s45 + x_ref[6].astype(f32))
        o_ref[...] = (s * (1.0 / 7.0)).astype(o_ref.dtype)
    else:  # 'max'  (no f32 upcast needed)
        m01 = jnp.maximum(x_ref[0], x_ref[1])
        m23 = jnp.maximum(x_ref[2], x_ref[3])
        m45 = jnp.maximum(x_ref[4], x_ref[5])
        m = jnp.maximum(jnp.maximum(m01, m23), jnp.maximum(m45, x_ref[6]))
        o_ref[...] = m.astype(o_ref.dtype)


@functools.partial(jax.jit, static_argnames=("pool_type",))
def pool_layer_batch_pallas(x, neigh_orders, pool_type="mean"):
    """x: (B, F, N_in); neigh_orders: int array with length >= N_out * 7."""
    B, F, N_in = x.shape
    BF = B * F
    N_out = (N_in + 6) // 4

    neigh = jnp.asarray(neigh_orders, dtype=jnp.int32)[: N_out * 7]
    neigh = neigh.reshape(N_out, 7)

    # --- tiling --------------------------------------------------------------
    # Sublane granule by element width (8 for f32, 16 for bf16, 32 for int8).
    sub = {4: 8, 2: 16, 1: 32}.get(jnp.dtype(x.dtype).itemsize, 8)
    TB = 256 if BF >= 256 else _round_up(BF, sub)
    BF_pad = _round_up(BF, TB)
    TN = 1024 if N_out >= 1024 else _round_up(N_out, 128)
    N_pad = _round_up(N_out, TN)

    # Pad the neighbor table along the output-node axis (index 0 is a valid
    # dummy; the padded output columns are sliced off after the kernel).
    if N_pad != N_out:
        neigh = jnp.pad(neigh, ((0, N_pad - N_out), (0, 0)))
    idx_t = neigh.T  # (7, N_pad)

    # --- gather in XLA, emitted directly in (7, BF_pad, N_pad) layout --------
    x_flat = x.reshape(BF, N_in)
    if BF_pad != BF:
        x_flat = jnp.pad(x_flat, ((0, BF_pad - BF), (0, 0)))
    # moveaxis directly on the gather result so it fuses into the gather
    # fusion; batch*feature stays on sublanes, nodes stay on lanes.
    xg = jnp.moveaxis(jnp.take(x_flat, idx_t, axis=1), 1, 0)  # (7, BF_pad, N_pad)

    # --- grid: both axes independent; larger-extent axis first (v7x megacore).
    grid_bf = BF_pad // TB
    grid_n = N_pad // TN
    if grid_n > grid_bf:
        grid = (grid_n, grid_bf)
        in_spec = pl.BlockSpec((7, TB, TN), lambda j, i: (0, i, j))
        out_spec = pl.BlockSpec((TB, TN), lambda j, i: (i, j))
    else:
        grid = (grid_bf, grid_n)
        in_spec = pl.BlockSpec((7, TB, TN), lambda i, j: (0, i, j))
        out_spec = pl.BlockSpec((TB, TN), lambda i, j: (i, j))

    kernel = functools.partial(_pool_kernel, pool_type=pool_type)

    out = pl.pallas_call(
        kernel,
        out_shape=jax.ShapeDtypeStruct((BF_pad, N_pad), x.dtype),
        grid_spec=pltpu.PrefetchScalarGridSpec(
            num_scalar_prefetch=0,
            grid=grid,
            in_specs=[in_spec],
            out_specs=out_spec,
        ),
        compiler_params=pltpu.CompilerParams(
            dimension_semantics=("parallel", "parallel"),
            vmem_limit_bytes=48 * 1024 * 1024,
            allow_input_fusion=[True],
        ),
    )(xg)

    # Drop padding, restore (B, F, N_out) — pure reshapes, no transposes.
    return out[:BF, :N_out].reshape(B, F, N_out)


def _reference(x, neigh_orders, pool_type="mean"):
    B, F, N_in = x.shape
    N_out = (N_in + 6) // 4
    g = x[:, :, neigh_orders[: N_out * 7]].reshape(B, F, N_out, 7)
    if pool_type == "mean":
        return jnp.mean(g, axis=3)
    return jnp.max(g, axis=3)


if __name__ == "__main__":
    key = jax.random.PRNGKey(0)
    kx, kn = jax.random.split(key)

    # Small icosahedral-like sizes: N_in = 162 nodes -> N_out = 42 nodes.
    B, F, N_in = 2, 4, 162
    N_out = (N_in + 6) // 4

    x = jax.random.normal(kx, (B, F, N_in), dtype=jnp.float32)
    # Synthetic deterministic neighbor-order table (would come from the mesh).
    neigh_orders = jax.random.randint(kn, (N_out * 7,), 0, N_in, dtype=jnp.int32)

    # mean pooling (module default)
    out_mean = pool_layer_batch_pallas(x, neigh_orders, pool_type="mean")
    jax.block_until_ready(out_mean)
    ref_mean = _reference(x, neigh_orders, pool_type="mean")
    assert out_mean.shape == (B, F, N_out)
    assert jnp.allclose(out_mean, ref_mean, rtol=1e-5, atol=1e-5)

    # max pooling
    out_max = pool_layer_batch_pallas(x, neigh_orders, pool_type="max")
    jax.block_until_ready(out_max)
    ref_max = _reference(x, neigh_orders, pool_type="max")
    assert out_max.shape == (B, F, N_out)
    assert jnp.allclose(out_max, ref_max, rtol=1e-5, atol=1e-5)

    print("KERNEL_OK")
</pallas_src>

<mosaic_0001>
module attributes {stable_mosaic.version = 11 : i64} {
  func.func @_pool_kernel(%arg0: i32, %arg1: i32, %arg2: memref<7x8x128xf32, #tpu.memory_space<vmem>>, %arg3: memref<8x128xf32, #tpu.memory_space<vmem>>) attributes {dimension_semantics = [#tpu.dimension_semantics<parallel>, #tpu.dimension_semantics<parallel>], iteration_bounds = array<i64: 1, 1>, scalar_prefetch = 0 : i64, scratch_operands = 0 : i64, tpu.core_type = #tpu.core_type<tc>, window_params = [{transform_indices = @transform_0, window_bounds = array<i64: 7, 8, 128>}, {transform_indices = @transform_1, window_bounds = array<i64: 8, 128>}]} {
    %c0 = arith.constant 0 : index
    %c0_0 = arith.constant 0 : index
    %c0_1 = arith.constant 0 : index
    %0 = vector.load %arg2[%c0, %c0_0, %c0_1] : memref<7x8x128xf32, #tpu.memory_space<vmem>>, vector<1x8x128xf32>
    %1 = vector.shape_cast %0 : vector<1x8x128xf32> to vector<8x128xf32>
    %c1 = arith.constant 1 : index
    %c0_2 = arith.constant 0 : index
    %c0_3 = arith.constant 0 : index
    %2 = vector.load %arg2[%c1, %c0_2, %c0_3] : memref<7x8x128xf32, #tpu.memory_space<vmem>>, vector<1x8x128xf32>
    %3 = vector.shape_cast %2 : vector<1x8x128xf32> to vector<8x128xf32>
    %4 = arith.addf %1, %3 : vector<8x128xf32>
    %c2 = arith.constant 2 : index
    %c0_4 = arith.constant 0 : index
    %c0_5 = arith.constant 0 : index
    %5 = vector.load %arg2[%c2, %c0_4, %c0_5] : memref<7x8x128xf32, #tpu.memory_space<vmem>>, vector<1x8x128xf32>
    %6 = vector.shape_cast %5 : vector<1x8x128xf32> to vector<8x128xf32>
    %c3 = arith.constant 3 : index
    %c0_6 = arith.constant 0 : index
    %c0_7 = arith.constant 0 : index
    %7 = vector.load %arg2[%c3, %c0_6, %c0_7] : memref<7x8x128xf32, #tpu.memory_space<vmem>>, vector<1x8x128xf32>
    %8 = vector.shape_cast %7 : vector<1x8x128xf32> to vector<8x128xf32>
    %9 = arith.addf %6, %8 : vector<8x128xf32>
    %c4 = arith.constant 4 : index
    %c0_8 = arith.constant 0 : index
    %c0_9 = arith.constant 0 : index
    %10 = vector.load %arg2[%c4, %c0_8, %c0_9] : memref<7x8x128xf32, #tpu.memory_space<vmem>>, vector<1x8x128xf32>
    %11 = vector.shape_cast %10 : vector<1x8x128xf32> to vector<8x128xf32>
    %c5 = arith.constant 5 : index
    %c0_10 = arith.constant 0 : index
    %c0_11 = arith.constant 0 : index
    %12 = vector.load %arg2[%c5, %c0_10, %c0_11] : memref<7x8x128xf32, #tpu.memory_space<vmem>>, vector<1x8x128xf32>
    %13 = vector.shape_cast %12 : vector<1x8x128xf32> to vector<8x128xf32>
    %14 = arith.addf %11, %13 : vector<8x128xf32>
    %15 = arith.addf %4, %9 : vector<8x128xf32>
    %c6 = arith.constant 6 : index
    %c0_12 = arith.constant 0 : index
    %c0_13 = arith.constant 0 : index
    %16 = vector.load %arg2[%c6, %c0_12, %c0_13] : memref<7x8x128xf32, #tpu.memory_space<vmem>>, vector<1x8x128xf32>
    %17 = vector.shape_cast %16 : vector<1x8x128xf32> to vector<8x128xf32>
    %18 = arith.addf %14, %17 : vector<8x128xf32>
    %19 = arith.addf %15, %18 : vector<8x128xf32>
    %cst = arith.constant 0.142857149 : f32
    %20 = vector.broadcast %cst : f32 to vector<8x128xf32>
    %21 = arith.mulf %19, %20 : vector<8x128xf32>
    %c0_14 = arith.constant 0 : index
    %c0_15 = arith.constant 0 : index
    %22 = vector.load %arg3[%c0_14, %c0_15] : memref<8x128xf32, #tpu.memory_space<vmem>>, vector<8x128xf32>
    tpu.vector_store %arg3[%c0_14, %c0_15], %21 {strides = array<i32>} : memref<8x128xf32, #tpu.memory_space<vmem>>, vector<8x128xf32>,
    return
  }
  func.func @transform_0(%arg0: i32, %arg1: i32) -> (i32, i32, i32) {
    %c0_i32 = arith.constant 0 : i32
    %c0_i32_0 = arith.constant 0 : i32
    return %c0_i32, %arg0, %arg1 : i32, i32, i32
  }
  func.func @transform_1(%arg0: i32, %arg1: i32) -> (i32, i32) {
    %c0_i32 = arith.constant 0 : i32
    return %arg0, %arg1 : i32, i32
  }
}

</mosaic_0001>

<llo_original>
// kernel: pool_layer_batch_pallas.2
$region0: #{pool_layer_batch_pallas.2}
  #allocation0 [shape = 'u32[]', space=smem, size = 0x4, offset = 0x4, fixed_abs, tag = 'smem constant byte address 0x4 - core index']
  #allocation1 [shape = 'u32[144,128]{1,0:T(1,128)}', space=vmem, size = 0x12000, scoped, tag = 'internal scratch']
  %s0 = inlined_call_operand.vmem [shape: f32[896,8], index: 0, kind: input, shape index: {}]
  %s1 = inlined_call_operand.<no memory space> [shape: f32[], index: 1, kind: input, shape index: {}]
  %s2 = inlined_call_operand.vmem [shape: pred[7,128], index: 2, kind: input, shape index: {}]
  %s3 = inlined_call_operand.hbm [shape: f32[8,128], index: 3, kind: output, shape index: {}]
  %s4 = sld [smem:[#allocation0]]
  $region18: #{pool_layer_batch_pallas.2} parent=0
    _
  %s6 = ssub.s32 1, %s4
  %s7 = scalar_select 0, %s6, %s4
  %v8 = vstv %s1
  $region1: #{pool_layer_batch_pallas.2} parent=0
    #allocation2 [shape = 'u8[4096]{0}', space=vmem, size = 0x1000, scoped, tag = 'output window, operand 0, single buffered']
    #allocation3 [shape = 's32[1]{0}', space=sflag, size = 0x4, scoped, tag = 'scoped memory for pool_layer_batch_pallas.2']
    #allocation4 [shape = 'u8[28672]{0}', space=vmem, size = 0x7000, dematerialized = true, scoped, tag = 'FusionAdapter Buffer %fusion.1 = f32[7,8,128]{2,1,0:T(8,128)} fusion(%param_0.20, %param_1.25, %param_2.20), kind=kLoop, calls=%fused_computation.4.clone, metadata={op_name="jit(pool_layer_batch_pallas)/jit(_take)/select_n" stack_frame_id=11}']
    %9 = vsyncpa [#allocation3], 0
    // Predicated region
    $region2: #{pool_layer_batch_pallas.2} parent=1 // pred_check
      _
    $region3: #{pool_layer_batch_pallas.2} parent=1 // pred_check_branch
      %11 = sbr.rel (0) target = $region5
    $region4: #{pool_layer_batch_pallas.2} parent=1 // pred_region
      _
    $region5: #{pool_layer_batch_pallas.2} parent=1 // pred_fallthru
      _
    // Predicated region
    $region6: #{pool_layer_batch_pallas.2} parent=1 // pred_check
      _
    $region7: #{pool_layer_batch_pallas.2} parent=1 // pred_check_branch
      %13 = sbr.rel (0) target = $region9
    $region8: #{pool_layer_batch_pallas.2} parent=1 // pred_region
      _
    $region9: #{pool_layer_batch_pallas.2} parent=1 // pred_fallthru
      _
    %v14 = vld [vmem:[%s0] sm:$0xff]
    %v15 = vld [vmem:[%s2] ss:$0 sm:$0xff]
    %v17 = vshra.s32 %v15, 0
    %v18 = vand.u32 %v17, 255
    %19 = xla_tuple %v18, %v14, %v8
    %20 = xla_tuple %19
    %vm21 = vcmp.ne.s32.totalorder %v18, 0
    %v22 = vsel %vm21, %v14, %v8
    %23 = xla_tuple %v22
    %25 = vst [vmem:[#allocation4] sm:$0xff] %v22
    %s26 = scalar_lea.vmem %s0, 8
    %v27 = vld [vmem:[%s26] sm:$0xff]
    %v28 = vld [vmem:[%s2] ss:$0 sm:$0xff]
    %v30 = vshra.s32 %v28, 8
    %v31 = vand.u32 %v30, 255
    %32 = xla_tuple %v31, %v27, %v8
    %33 = xla_tuple %32
    %vm34 = vcmp.ne.s32.totalorder %v31, 0
    %v35 = vsel %vm34, %v27, %v8
    %36 = xla_tuple %v35
    %s37 = scalar_lea.vmem [#allocation4], 8
    %39 = vst [vmem:[%s37] sm:$0xff] %v35
    %s40 = scalar_lea.vmem %s0, 16
    %v41 = vld [vmem:[%s40] sm:$0xff]
    %v42 = vld [vmem:[%s2] ss:$0 sm:$0xff]
    %v44 = vshra.s32 %v42, 16
    %v45 = vand.u32 %v44, 255
    %46 = xla_tuple %v45, %v41, %v8
    %47 = xla_tuple %46
    %vm48 = vcmp.ne.s32.totalorder %v45, 0
    %v49 = vsel %vm48, %v41, %v8
    %50 = xla_tuple %v49
    %s51 = scalar_lea.vmem [#allocation4], 16
    %53 = vst [vmem:[%s51] sm:$0xff] %v49
    %s54 = scalar_lea.vmem %s0, 24
    %v55 = vld [vmem:[%s54] sm:$0xff]
    %v56 = vld [vmem:[%s2] ss:$0 sm:$0xff]
    %v58 = vshra.s32 %v56, 24
    %v59 = vand.u32 %v58, 255
    %60 = xla_tuple %v59, %v55, %v8
    %61 = xla_tuple %60
    %vm62 = vcmp.ne.s32.totalorder %v59, 0
    %v63 = vsel %vm62, %v55, %v8
    %64 = xla_tuple %v63
    %s65 = scalar_lea.vmem [#allocation4], 24
    %67 = vst [vmem:[%s65] sm:$0xff] %v63
    %s68 = scalar_lea.vmem %s0, 32
    %v69 = vld [vmem:[%s68] sm:$0xff]
    %s70 = scalar_lea.vmem %s2, 1
    %v71 = vld [vmem:[%s70] ss:$0 sm:$0xff]
    %v73 = vshra.s32 %v71, 0
    %v74 = vand.u32 %v73, 255
    %75 = xla_tuple %v74, %v69, %v8
    %76 = xla_tuple %75
    %vm77 = vcmp.ne.s32.totalorder %v74, 0
    %v78 = vsel %vm77, %v69, %v8
    %79 = xla_tuple %v78
    %s80 = scalar_lea.vmem [#allocation4], 32
    %82 = vst [vmem:[%s80] sm:$0xff] %v78
    %s83 = scalar_lea.vmem %s0, 40
    %v84 = vld [vmem:[%s83] sm:$0xff]
    %s85 = scalar_lea.vmem %s2, 1
    %v86 = vld [vmem:[%s85] ss:$0 sm:$0xff]
    %v88 = vshra.s32 %v86, 8
    %v89 = vand.u32 %v88, 255
    %90 = xla_tuple %v89, %v84, %v8
    %91 = xla_tuple %90
    %vm92 = vcmp.ne.s32.totalorder %v89, 0
    %v93 = vsel %vm92, %v84, %v8
    %94 = xla_tuple %v93
    %s95 = scalar_lea.vmem [#allocation4], 40
    %97 = vst [vmem:[%s95] sm:$0xff] %v93
    %s98 = scalar_lea.vmem %s0, 48
    %v99 = vld [vmem:[%s98] sm:$0xff]
    %s100 = scalar_lea.vmem %s2, 1
    %v101 = vld [vmem:[%s100] ss:$0 sm:$0xff]
    %v103 = vshra.s32 %v101, 16
    %v104 = vand.u32 %v103, 255
    %105 = xla_tuple %v104, %v99, %v8
    %106 = xla_tuple %105
    %vm107 = vcmp.ne.s32.totalorder %v104, 0
    %v108 = vsel %vm107, %v99, %v8
    %109 = xla_tuple %v108
    %s110 = scalar_lea.vmem [#allocation4], 48
    %112 = vst [vmem:[%s110] sm:$0xff] %v108
    %v113 = vld [vmem:[#allocation4] sm:$0xff]
    %s114 = scalar_lea.vmem [#allocation4], 8
    %v115 = vld [vmem:[%s114] sm:$0xff]
    %v116 = vadd.f32 %v113, %v115
    %s117 = scalar_lea.vmem [#allocation4], 16
    %v118 = vld [vmem:[%s117] sm:$0xff]
    %s119 = scalar_lea.vmem [#allocation4], 24
    %v120 = vld [vmem:[%s119] sm:$0xff]
    %v121 = vadd.f32 %v118, %v120
    %s122 = scalar_lea.vmem [#allocation4], 32
    %v123 = vld [vmem:[%s122] sm:$0xff]
    %s124 = scalar_lea.vmem [#allocation4], 40
    %v125 = vld [vmem:[%s124] sm:$0xff]
    %v126 = vadd.f32 %v123, %v125
    %v127 = vadd.f32 %v116, %v121
    %s128 = scalar_lea.vmem [#allocation4], 48
    %v129 = vld [vmem:[%s128] sm:$0xff]
    %v130 = vadd.f32 %v126, %v129
    %v131 = vadd.f32 %v127, %v130
    %v132 = vmul.f32 %v131, 0.14285715
    %133 = vst [vmem:[#allocation2] sm:$0xff] %v132
    // Predicated region
    $region10: #{pool_layer_batch_pallas.2} parent=1 // pred_check
      _
    $region11: #{pool_layer_batch_pallas.2} parent=1 // pred_check_branch
      %135 = sbr.rel (0) target = $region13
    $region12: #{pool_layer_batch_pallas.2} parent=1 // pred_region
      %s137 = ssub.s32 128, 128
      %138 = vsyncadd [#allocation3], %s137
      %s140 = sshll.u32 [#allocation2], 4
      %s141 = int_to_ptr.vmem [resolvable:$true] %s140
      %143 = dma.vmem_to_hbm [thread:$0]  %s141, 128, %s3, [#allocation3]
    $region13: #{pool_layer_batch_pallas.2} parent=1 // pred_fallthru
      _
    // Predicated region
    $region14: #{pool_layer_batch_pallas.2} parent=1 // pred_check
      _
    $region15: #{pool_layer_batch_pallas.2} parent=1 // pred_check_branch
      %145 = sbr.rel (0) target = $region17
    $region16: #{pool_layer_batch_pallas.2} parent=1 // pred_region
      %146 = dma.done [#allocation3], 128
    $region17: #{pool_layer_batch_pallas.2} parent=1 // pred_fallthru
      _
    %147 = vsyncpa [#allocation3], 1

</llo_original>
